<compile_context>
chip_gen: v7x
topology: tpu7x:2x2x1
jax: 0.10.0
libtpu: 0.0.40
codegen_flags: <defaults>
</compile_context>

<pallas_src>
import functools

import numpy as np
import jax
import jax.numpy as jnp
from jax.experimental import pallas as pl
from jax.experimental.pallas import tpu as pltpu


def _round_up(x, m):
    return (x + m - 1) // m * m


def _shift_flat(v, delta, wrap_delta, wrap_cond, M):
    """Value of v at flat index (m + delta) with circular wrap fix.

    naive   = v[(m + delta)      mod M]   (plain lane roll)
    wrapped = v[(m + wrap_delta) mod M]   (roll corrected for the H/W wrap)
    jnp.roll semantics: roll(x, s)[m] = x[(m - s) mod M]  -> shift = -delta.
    """
    naive = pltpu.roll(v, (-delta) % M, 1)
    wrapped = pltpu.roll(v, (-wrap_delta) % M, 1)
    return jnp.where(wrap_cond, wrapped, naive)


def _fused_marked_cnn_kernel(x_ref, mask_ref, xpos_ref, ypos_ref, *rest,
                             N, H, W, K, dim, n_layers):
    """Whole MarkedCNN forward in one kernel (single grid step).

    rest = (w1, b1, ..., wn, bn, o_ref, h0_scratch)
    Layout: activations are (C_pad, M) with M = N*H*W on lanes, flat index
    m = n*H*W + y*W + x. Padded channel rows are zero and carry zero weights.
    """
    o_ref = rest[2 * n_layers]
    h0_s = rest[2 * n_layers + 1]
    M = N * H * W
    p = (K - 1) // 2

    # ---- assemble layer-0 input: [x channels, mask channel, zero pad rows] ----
    h0_s[...] = jnp.zeros_like(h0_s)
    h0_s[pl.ds(0, dim), :] = x_ref[...]          # (dim, M)
    h0_s[pl.ds(dim, 1), :] = mask_ref[...]       # (1, M) mask channel
    h = h0_s[...]                                # (cin0_pad, M) f32

    xpos = xpos_ref[...]                         # (1, M) int32: m % W
    ypos = ypos_ref[...]                         # (1, M) int32: (m // W) % H

    for li in range(n_layers):
        w_ref = rest[2 * li]                     # (cout_p, K*K*cin_p)
        b_ref = rest[2 * li + 1]                 # (cout_p, 1)
        cin_p = h.shape[0]
        assert w_ref.shape[1] == K * K * cin_p

        # Wrap-fix conditions, hoisted out of the tap loop (broadcast once).
        xb = jnp.broadcast_to(xpos, (cin_p, M))
        yb = jnp.broadcast_to(ypos, (cin_p, M))

        # In-kernel circular im2col: K*K shifted taps via lane rolls (XLU).
        taps = []
        for dy in range(-p, p + 1):
            if dy == 0:
                hy = h
            else:
                cond = (yb >= H - dy) if dy > 0 else (yb < -dy)
                hy = _shift_flat(h, dy * W,
                                 dy * W - (H * W if dy > 0 else -H * W),
                                 cond, M)
            for dx in range(-p, p + 1):
                if dx == 0:
                    t = hy
                else:
                    cond = (xb >= W - dx) if dx > 0 else (xb < -dx)
                    t = _shift_flat(hy, dx,
                                    dx - (W if dx > 0 else -W),
                                    cond, M)
                taps.append(t)
        cols = jnp.concatenate(taps, axis=0)     # (K*K*cin_p, M), 8-aligned rows

        # One MXU matmul per layer, Cout on sublanes / M on lanes (lane-dense).
        acc = jnp.dot(w_ref[...], cols, preferred_element_type=jnp.float32)
        acc = acc + b_ref[...]                   # (cout_p, M) + (cout_p, 1)
        if li < n_layers - 1:
            acc = jnp.tanh(acc)
        h = acc                                  # stays resident for next layer

    o_ref[...] = h.astype(o_ref.dtype)


def prepare_params(params):
    """One-time (outside jit) weight transform + 8-alignment padding.

    params: list of (w_hwio (K,K,Cin,Cout), b (Cout,))
    returns list of (wT (Cout_pad, K*K*Cin_pad), b (Cout_pad, 1)),
    contraction index r = tap*Cin_pad + cin, tap = ky*K + kx.
    """
    prepped = []
    for w_hwio, b in params:
        K, K2, cin, cout = w_hwio.shape
        assert K == K2 and K % 2 == 1, "ksize must be odd"
        cin_p = _round_up(cin, 8)
        cout_p = _round_up(cout, 8)
        w = jnp.transpose(jnp.reshape(w_hwio, (K * K, cin, cout)), (2, 0, 1))
        w = jnp.pad(w, ((0, cout_p - cout), (0, 0), (0, cin_p - cin)))
        wT = jnp.reshape(w, (cout_p, K * K * cin_p)).astype(jnp.float32)
        b2 = jnp.pad(b, (0, cout_p - cout)).reshape(cout_p, 1).astype(jnp.float32)
        prepped.append((wT, b2))
    return prepped


def marked_cnn_forward(x_nchw, mask, prepped_params):
    """MarkedCNN.forward (2D mask, circular padding, Tanh) — fused Pallas kernel.

    x_nchw: (N, dim, H, W); mask: (H, W); prepped_params from prepare_params.
    Returns (N, dim, H, W).
    """
    N, dim, H, W = x_nchw.shape
    assert mask.shape == (H, W)
    M = N * H * W
    n_layers = len(prepped_params)

    cin0_p = _round_up(dim + 1, 8)
    kk = prepped_params[0][0].shape[1] // cin0_p
    K = int(round(kk ** 0.5))
    assert K * K * cin0_p == prepped_params[0][0].shape[1]
    cout_last_p = prepped_params[-1][0].shape[0]

    # Tiny XLA-side layout prep (channels-first, lane-flattened).
    x_cm = jnp.transpose(x_nchw, (1, 0, 2, 3)).reshape(dim, M)
    mask_flat = jnp.broadcast_to(mask.astype(x_nchw.dtype)[None],
                                 (N, H, W)).reshape(1, M)

    # Static lane-position rows for the in-kernel circular wrap fix (constants).
    lane = np.arange(M, dtype=np.int32)
    xpos = jnp.asarray((lane % W).reshape(1, M))
    ypos = jnp.asarray(((lane // W) % H).reshape(1, M))

    args = [x_cm, mask_flat, xpos, ypos]
    in_specs = [
        pl.BlockSpec((dim, M), lambda i: (0, 0)),
        pl.BlockSpec((1, M), lambda i: (0, 0)),
        pl.BlockSpec((1, M), lambda i: (0, 0)),
        pl.BlockSpec((1, M), lambda i: (0, 0)),
    ]
    for wT, b2 in prepped_params:
        args.extend([wT, b2])
        in_specs.append(pl.BlockSpec(wT.shape, lambda i: (0, 0)))
        in_specs.append(pl.BlockSpec(b2.shape, lambda i: (0, 0)))

    out = pl.pallas_call(
        functools.partial(_fused_marked_cnn_kernel,
                          N=N, H=H, W=W, K=K, dim=dim, n_layers=n_layers),
        out_shape=jax.ShapeDtypeStruct((cout_last_p, M), x_nchw.dtype),
        grid=(1,),                                # single block: whole net fits VMEM
        in_specs=in_specs,
        out_specs=pl.BlockSpec((cout_last_p, M), lambda i: (0, 0)),
        scratch_shapes=[pltpu.VMEM((cin0_p, M), jnp.float32)],
    )(*args)

    out = out[:dim].reshape(dim, N, H, W)         # drop padded channels
    return jnp.transpose(out, (1, 0, 2, 3))       # back to NCHW


# ---------------- pure-JAX reference (for correctness check) ----------------
def _conv_ref(x_nhwc, w, b):
    p = (w.shape[0] - 1) // 2
    xp = jnp.pad(x_nhwc, ((0, 0), (p, p), (p, p), (0, 0)), mode="wrap")
    y = jax.lax.conv_general_dilated(
        xp, w, window_strides=(1, 1), padding="VALID",
        dimension_numbers=("NHWC", "HWIO", "NHWC"))
    return y + b


def _forward_ref(x_nchw, mask, params):
    x = jnp.transpose(x_nchw, (0, 2, 3, 1))
    N, H, W, _ = x.shape
    x_mask = jnp.broadcast_to(mask[None, :, :, None].astype(x.dtype), (N, H, W, 1))
    h = jnp.concatenate([x, x_mask], axis=-1)
    for i, (w, b) in enumerate(params):
        h = _conv_ref(h, w, b)
        if i < len(params) - 1:
            h = jnp.tanh(h)
    return jnp.transpose(h, (0, 3, 1, 2))


def init_params(key, dim, hdims, ksize):
    """Deterministic parameter init mirroring MarkedCNN.__init__ layer shapes."""
    params = []
    dims_in_out = []
    d_in = dim + 1
    d_out = dim + 1
    for d_out in hdims:
        dims_in_out.append((d_in, d_out))
        d_in = d_out
    dims_in_out.append((d_out, dim))  # final conv back to `dim` channels
    for (cin, cout) in dims_in_out:
        key, kw, kb = jax.random.split(key, 3)
        w = 0.1 * jax.random.normal(kw, (ksize, ksize, cin, cout), jnp.float32)
        b = 0.1 * jax.random.normal(kb, (cout,), jnp.float32)
        params.append((w, b))
    return params


if __name__ == "__main__":
    # Small shapes consistent with the module: batch=2, dim=4, spatial 16x16.
    N, DIM, H, W = 2, 4, 16, 16
    HDIMS = [8]
    KSIZE = 3

    key = jax.random.PRNGKey(0)
    kx, km, kp = jax.random.split(key, 3)

    x = jax.random.normal(kx, (N, DIM, H, W), jnp.float32)         # NCHW
    mask = (jax.random.uniform(km, (H, W)) < 0.25).astype(jnp.float32)
    params = init_params(kp, DIM, HDIMS, KSIZE)
    prepped = prepare_params(params)        # one-time weight transform (outside jit)

    fwd = jax.jit(marked_cnn_forward)
    out = jax.block_until_ready(fwd(x, mask, prepped))
    assert out.shape == (N, DIM, H, W), out.shape

    ref = jax.block_until_ready(_forward_ref(x, mask, params))
    assert jnp.allclose(out, ref, atol=1e-5, rtol=1e-5), (
        float(jnp.max(jnp.abs(out - ref)))
    )

    print("KERNEL_OK")
</pallas_src>

<mosaic_0001>
module attributes {stable_mosaic.version = 11 : i64} {
  func.func @_fused_marked_cnn_kernel(%arg0: i32, %arg1: memref<4x512xf32, #tpu.memory_space<vmem>>, %arg2: memref<1x512xf32, #tpu.memory_space<vmem>>, %arg3: memref<1x512xi32, #tpu.memory_space<vmem>>, %arg4: memref<1x512xi32, #tpu.memory_space<vmem>>, %arg5: memref<8x72xf32, #tpu.memory_space<vmem>>, %arg6: memref<8x1xf32, #tpu.memory_space<vmem>>, %arg7: memref<8x72xf32, #tpu.memory_space<vmem>>, %arg8: memref<8x1xf32, #tpu.memory_space<vmem>>, %arg9: memref<8x512xf32, #tpu.memory_space<vmem>>, %arg10: memref<8x512xf32, #tpu.memory_space<vmem>>) attributes {dimension_semantics = [#tpu.dimension_semantics<arbitrary>], iteration_bounds = array<i64: 1>, scalar_prefetch = 0 : i64, scratch_operands = 1 : i64, tpu.core_type = #tpu.core_type<tc>, window_params = [{pipeline_mode = #tpu.pipeline_mode<synchronous>, transform_indices = @transform_0, window_bounds = array<i64: 4, 512>}, {pipeline_mode = #tpu.pipeline_mode<synchronous>, transform_indices = @transform_1, window_bounds = array<i64: 1, 512>}, {pipeline_mode = #tpu.pipeline_mode<synchronous>, transform_indices = @transform_2, window_bounds = array<i64: 1, 512>}, {pipeline_mode = #tpu.pipeline_mode<synchronous>, transform_indices = @transform_3, window_bounds = array<i64: 1, 512>}, {pipeline_mode = #tpu.pipeline_mode<synchronous>, transform_indices = @transform_4, window_bounds = array<i64: 8, 72>}, {pipeline_mode = #tpu.pipeline_mode<synchronous>, transform_indices = @transform_5, window_bounds = array<i64: 8, 1>}, {pipeline_mode = #tpu.pipeline_mode<synchronous>, transform_indices = @transform_6, window_bounds = array<i64: 8, 72>}, {pipeline_mode = #tpu.pipeline_mode<synchronous>, transform_indices = @transform_7, window_bounds = array<i64: 8, 1>}, {pipeline_mode = #tpu.pipeline_mode<synchronous>, transform_indices = @transform_8, window_bounds = array<i64: 8, 512>}]} {
    %cst = arith.constant 0.000000e+00 : f32
    %0 = vector.broadcast %cst : f32 to vector<8x512xf32>
    %c0 = arith.constant 0 : index
    %c0_0 = arith.constant 0 : index
    %1 = vector.load %arg10[%c0, %c0_0] : memref<8x512xf32, #tpu.memory_space<vmem>>, vector<8x512xf32>
    tpu.vector_store %arg10[%c0, %c0_0], %0 {strides = array<i32>} : memref<8x512xf32, #tpu.memory_space<vmem>>, vector<8x512xf32>,
    %c0_1 = arith.constant 0 : index
    %c0_2 = arith.constant 0 : index
    %2 = vector.load %arg1[%c0_1, %c0_2] : memref<4x512xf32, #tpu.memory_space<vmem>>, vector<4x512xf32>
    %c0_3 = arith.constant 0 : index
    %c0_4 = arith.constant 0 : index
    %3 = vector.load %arg10[%c0_3, %c0_4] : memref<8x512xf32, #tpu.memory_space<vmem>>, vector<4x512xf32>
    tpu.vector_store %arg10[%c0_3, %c0_4], %2 {strides = array<i32>} : memref<8x512xf32, #tpu.memory_space<vmem>>, vector<4x512xf32>,
    %c0_5 = arith.constant 0 : index
    %c0_6 = arith.constant 0 : index
    %4 = vector.load %arg2[%c0_5, %c0_6] : memref<1x512xf32, #tpu.memory_space<vmem>>, vector<1x512xf32>
    %c4 = arith.constant 4 : index
    %c0_7 = arith.constant 0 : index
    %5 = vector.load %arg10[%c4, %c0_7] : memref<8x512xf32, #tpu.memory_space<vmem>>, vector<1x512xf32>
    tpu.vector_store %arg10[%c4, %c0_7], %4 {strides = array<i32>} : memref<8x512xf32, #tpu.memory_space<vmem>>, vector<1x512xf32>,
    %c0_8 = arith.constant 0 : index
    %c0_9 = arith.constant 0 : index
    %6 = vector.load %arg10[%c0_8, %c0_9] : memref<8x512xf32, #tpu.memory_space<vmem>>, vector<8x512xf32>
    %c0_10 = arith.constant 0 : index
    %c0_11 = arith.constant 0 : index
    %7 = vector.load %arg3[%c0_10, %c0_11] : memref<1x512xi32, #tpu.memory_space<vmem>>, vector<1x512xi32>
    %c0_12 = arith.constant 0 : index
    %c0_13 = arith.constant 0 : index
    %8 = vector.load %arg4[%c0_12, %c0_13] : memref<1x512xi32, #tpu.memory_space<vmem>>, vector<1x512xi32>
    %9 = vector.shape_cast %7 : vector<1x512xi32> to vector<1x512xi32>
    %10 = vector.broadcast %9 : vector<1x512xi32> to vector<8x512xi32>
    %11 = vector.shape_cast %8 : vector<1x512xi32> to vector<1x512xi32>
    %12 = vector.broadcast %11 : vector<1x512xi32> to vector<8x512xi32>
    %c1_i32 = arith.constant 1 : i32
    %13 = vector.broadcast %c1_i32 : i32 to vector<8x512xi32>
    %14 = arith.cmpi slt, %12, %13 : vector<8x512xi32>
    %c16_i32 = arith.constant 16 : i32
    %15 = tpu.dynamic_rotate %6 by %c16_i32 dim 1 : vector<8x512xf32>, i32 -> vector<8x512xf32>
    %c272_i32 = arith.constant 272 : i32
    %16 = tpu.dynamic_rotate %6 by %c272_i32 dim 1 : vector<8x512xf32>, i32 -> vector<8x512xf32>
    %17 = arith.select %14, %16, %15 : vector<8x512xi1>, vector<8x512xf32>
    %c1_i32_14 = arith.constant 1 : i32
    %18 = vector.broadcast %c1_i32_14 : i32 to vector<8x512xi32>
    %19 = arith.cmpi slt, %10, %18 : vector<8x512xi32>
    %c1_i32_15 = arith.constant 1 : i32
    %20 = tpu.dynamic_rotate %17 by %c1_i32_15 dim 1 : vector<8x512xf32>, i32 -> vector<8x512xf32>
    %c497_i32 = arith.constant 497 : i32
    %21 = tpu.dynamic_rotate %17 by %c497_i32 dim 1 : vector<8x512xf32>, i32 -> vector<8x512xf32>
    %22 = arith.select %19, %21, %20 : vector<8x512xi1>, vector<8x512xf32>
    %c15_i32 = arith.constant 15 : i32
    %23 = vector.broadcast %c15_i32 : i32 to vector<8x512xi32>
    %24 = arith.cmpi sge, %10, %23 : vector<8x512xi32>
    %c511_i32 = arith.constant 511 : i32
    %25 = tpu.dynamic_rotate %17 by %c511_i32 dim 1 : vector<8x512xf32>, i32 -> vector<8x512xf32>
    %c15_i32_16 = arith.constant 15 : i32
    %26 = tpu.dynamic_rotate %17 by %c15_i32_16 dim 1 : vector<8x512xf32>, i32 -> vector<8x512xf32>
    %27 = arith.select %24, %26, %25 : vector<8x512xi1>, vector<8x512xf32>
    %c1_i32_17 = arith.constant 1 : i32
    %28 = vector.broadcast %c1_i32_17 : i32 to vector<8x512xi32>
    %29 = arith.cmpi slt, %10, %28 : vector<8x512xi32>
    %c1_i32_18 = arith.constant 1 : i32
    %30 = tpu.dynamic_rotate %6 by %c1_i32_18 dim 1 : vector<8x512xf32>, i32 -> vector<8x512xf32>
    %c497_i32_19 = arith.constant 497 : i32
    %31 = tpu.dynamic_rotate %6 by %c497_i32_19 dim 1 : vector<8x512xf32>, i32 -> vector<8x512xf32>
    %32 = arith.select %29, %31, %30 : vector<8x512xi1>, vector<8x512xf32>
    %c15_i32_20 = arith.constant 15 : i32
    %33 = vector.broadcast %c15_i32_20 : i32 to vector<8x512xi32>
    %34 = arith.cmpi sge, %10, %33 : vector<8x512xi32>
    %c511_i32_21 = arith.constant 511 : i32
    %35 = tpu.dynamic_rotate %6 by %c511_i32_21 dim 1 : vector<8x512xf32>, i32 -> vector<8x512xf32>
    %c15_i32_22 = arith.constant 15 : i32
    %36 = tpu.dynamic_rotate %6 by %c15_i32_22 dim 1 : vector<8x512xf32>, i32 -> vector<8x512xf32>
    %37 = arith.select %34, %36, %35 : vector<8x512xi1>, vector<8x512xf32>
    %c15_i32_23 = arith.constant 15 : i32
    %38 = vector.broadcast %c15_i32_23 : i32 to vector<8x512xi32>
    %39 = arith.cmpi sge, %12, %38 : vector<8x512xi32>
    %c496_i32 = arith.constant 496 : i32
    %40 = tpu.dynamic_rotate %6 by %c496_i32 dim 1 : vector<8x512xf32>, i32 -> vector<8x512xf32>
    %c240_i32 = arith.constant 240 : i32
    %41 = tpu.dynamic_rotate %6 by %c240_i32 dim 1 : vector<8x512xf32>, i32 -> vector<8x512xf32>
    %42 = arith.select %39, %41, %40 : vector<8x512xi1>, vector<8x512xf32>
    %c1_i32_24 = arith.constant 1 : i32
    %43 = vector.broadcast %c1_i32_24 : i32 to vector<8x512xi32>
    %44 = arith.cmpi slt, %10, %43 : vector<8x512xi32>
    %c1_i32_25 = arith.constant 1 : i32
    %45 = tpu.dynamic_rotate %42 by %c1_i32_25 dim 1 : vector<8x512xf32>, i32 -> vector<8x512xf32>
    %c497_i32_26 = arith.constant 497 : i32
    %46 = tpu.dynamic_rotate %42 by %c497_i32_26 dim 1 : vector<8x512xf32>, i32 -> vector<8x512xf32>
    %47 = arith.select %44, %46, %45 : vector<8x512xi1>, vector<8x512xf32>
    %c15_i32_27 = arith.constant 15 : i32
    %48 = vector.broadcast %c15_i32_27 : i32 to vector<8x512xi32>
    %49 = arith.cmpi sge, %10, %48 : vector<8x512xi32>
    %c511_i32_28 = arith.constant 511 : i32
    %50 = tpu.dynamic_rotate %42 by %c511_i32_28 dim 1 : vector<8x512xf32>, i32 -> vector<8x512xf32>
    %c15_i32_29 = arith.constant 15 : i32
    %51 = tpu.dynamic_rotate %42 by %c15_i32_29 dim 1 : vector<8x512xf32>, i32 -> vector<8x512xf32>
    %52 = arith.select %49, %51, %50 : vector<8x512xi1>, vector<8x512xf32>
    %53 = tpu.concatenate %22, %17, %27, %32, %6, %37, %47, %42, %52 in 0 : vector<8x512xf32>, vector<8x512xf32>, vector<8x512xf32>, vector<8x512xf32>, vector<8x512xf32>, vector<8x512xf32>, vector<8x512xf32>, vector<8x512xf32>, vector<8x512xf32> -> vector<72x512xf32>
    %c0_30 = arith.constant 0 : index
    %c0_31 = arith.constant 0 : index
    %54 = vector.load %arg5[%c0_30, %c0_31] : memref<8x72xf32, #tpu.memory_space<vmem>>, vector<8x72xf32>
    %cst_32 = arith.constant dense<0.000000e+00> : vector<8x512xf32>
    %55 = tpu.matmul %54, %53, %cst_32 {dimension_numbers = #tpu.dot_dimension_numbers<[1], [0], [0], [1], [0, 0, 1, 1], [], []>} : vector<8x72xf32>, vector<72x512xf32>, vector<8x512xf32> -> vector<8x512xf32>
    %c0_33 = arith.constant 0 : index
    %c0_34 = arith.constant 0 : index
    %56 = vector.load %arg6[%c0_33, %c0_34] : memref<8x1xf32, #tpu.memory_space<vmem>>, vector<8x1xf32>
    %57 = vector.broadcast %56 : vector<8x1xf32> to vector<8x512xf32>
    %58 = arith.addf %55, %57 : vector<8x512xf32>
    %59 = math.tanh %58 : vector<8x512xf32>
    %60 = vector.shape_cast %7 : vector<1x512xi32> to vector<1x512xi32>
    %61 = vector.broadcast %60 : vector<1x512xi32> to vector<8x512xi32>
    %62 = vector.shape_cast %8 : vector<1x512xi32> to vector<1x512xi32>
    %63 = vector.broadcast %62 : vector<1x512xi32> to vector<8x512xi32>
    %c1_i32_35 = arith.constant 1 : i32
    %64 = vector.broadcast %c1_i32_35 : i32 to vector<8x512xi32>
    %65 = arith.cmpi slt, %63, %64 : vector<8x512xi32>
    %c16_i32_36 = arith.constant 16 : i32
    %66 = tpu.dynamic_rotate %59 by %c16_i32_36 dim 1 : vector<8x512xf32>, i32 -> vector<8x512xf32>
    %c272_i32_37 = arith.constant 272 : i32
    %67 = tpu.dynamic_rotate %59 by %c272_i32_37 dim 1 : vector<8x512xf32>, i32 -> vector<8x512xf32>
    %68 = arith.select %65, %67, %66 : vector<8x512xi1>, vector<8x512xf32>
    %c1_i32_38 = arith.constant 1 : i32
    %69 = vector.broadcast %c1_i32_38 : i32 to vector<8x512xi32>
    %70 = arith.cmpi slt, %61, %69 : vector<8x512xi32>
    %c1_i32_39 = arith.constant 1 : i32
    %71 = tpu.dynamic_rotate %68 by %c1_i32_39 dim 1 : vector<8x512xf32>, i32 -> vector<8x512xf32>
    %c497_i32_40 = arith.constant 497 : i32
    %72 = tpu.dynamic_rotate %68 by %c497_i32_40 dim 1 : vector<8x512xf32>, i32 -> vector<8x512xf32>
    %73 = arith.select %70, %72, %71 : vector<8x512xi1>, vector<8x512xf32>
    %c15_i32_41 = arith.constant 15 : i32
    %74 = vector.broadcast %c15_i32_41 : i32 to vector<8x512xi32>
    %75 = arith.cmpi sge, %61, %74 : vector<8x512xi32>
    %c511_i32_42 = arith.constant 511 : i32
    %76 = tpu.dynamic_rotate %68 by %c511_i32_42 dim 1 : vector<8x512xf32>, i32 -> vector<8x512xf32>
    %c15_i32_43 = arith.constant 15 : i32
    %77 = tpu.dynamic_rotate %68 by %c15_i32_43 dim 1 : vector<8x512xf32>, i32 -> vector<8x512xf32>
    %78 = arith.select %75, %77, %76 : vector<8x512xi1>, vector<8x512xf32>
    %c1_i32_44 = arith.constant 1 : i32
    %79 = vector.broadcast %c1_i32_44 : i32 to vector<8x512xi32>
    %80 = arith.cmpi slt, %61, %79 : vector<8x512xi32>
    %c1_i32_45 = arith.constant 1 : i32
    %81 = tpu.dynamic_rotate %59 by %c1_i32_45 dim 1 : vector<8x512xf32>, i32 -> vector<8x512xf32>
    %c497_i32_46 = arith.constant 497 : i32
    %82 = tpu.dynamic_rotate %59 by %c497_i32_46 dim 1 : vector<8x512xf32>, i32 -> vector<8x512xf32>
    %83 = arith.select %80, %82, %81 : vector<8x512xi1>, vector<8x512xf32>
    %c15_i32_47 = arith.constant 15 : i32
    %84 = vector.broadcast %c15_i32_47 : i32 to vector<8x512xi32>
    %85 = arith.cmpi sge, %61, %84 : vector<8x512xi32>
    %c511_i32_48 = arith.constant 511 : i32
    %86 = tpu.dynamic_rotate %59 by %c511_i32_48 dim 1 : vector<8x512xf32>, i32 -> vector<8x512xf32>
    %c15_i32_49 = arith.constant 15 : i32
    %87 = tpu.dynamic_rotate %59 by %c15_i32_49 dim 1 : vector<8x512xf32>, i32 -> vector<8x512xf32>
    %88 = arith.select %85, %87, %86 : vector<8x512xi1>, vector<8x512xf32>
    %c15_i32_50 = arith.constant 15 : i32
    %89 = vector.broadcast %c15_i32_50 : i32 to vector<8x512xi32>
    %90 = arith.cmpi sge, %63, %89 : vector<8x512xi32>
    %c496_i32_51 = arith.constant 496 : i32
    %91 = tpu.dynamic_rotate %59 by %c496_i32_51 dim 1 : vector<8x512xf32>, i32 -> vector<8x512xf32>
    %c240_i32_52 = arith.constant 240 : i32
    %92 = tpu.dynamic_rotate %59 by %c240_i32_52 dim 1 : vector<8x512xf32>, i32 -> vector<8x512xf32>
    %93 = arith.select %90, %92, %91 : vector<8x512xi1>, vector<8x512xf32>
    %c1_i32_53 = arith.constant 1 : i32
    %94 = vector.broadcast %c1_i32_53 : i32 to vector<8x512xi32>
    %95 = arith.cmpi slt, %61, %94 : vector<8x512xi32>
    %c1_i32_54 = arith.constant 1 : i32
    %96 = tpu.dynamic_rotate %93 by %c1_i32_54 dim 1 : vector<8x512xf32>, i32 -> vector<8x512xf32>
    %c497_i32_55 = arith.constant 497 : i32
    %97 = tpu.dynamic_rotate %93 by %c497_i32_55 dim 1 : vector<8x512xf32>, i32 -> vector<8x512xf32>
    %98 = arith.select %95, %97, %96 : vector<8x512xi1>, vector<8x512xf32>
    %c15_i32_56 = arith.constant 15 : i32
    %99 = vector.broadcast %c15_i32_56 : i32 to vector<8x512xi32>
    %100 = arith.cmpi sge, %61, %99 : vector<8x512xi32>
    %c511_i32_57 = arith.constant 511 : i32
    %101 = tpu.dynamic_rotate %93 by %c511_i32_57 dim 1 : vector<8x512xf32>, i32 -> vector<8x512xf32>
    %c15_i32_58 = arith.constant 15 : i32
    %102 = tpu.dynamic_rotate %93 by %c15_i32_58 dim 1 : vector<8x512xf32>, i32 -> vector<8x512xf32>
    %103 = arith.select %100, %102, %101 : vector<8x512xi1>, vector<8x512xf32>
    %104 = tpu.concatenate %73, %68, %78, %83, %59, %88, %98, %93, %103 in 0 : vector<8x512xf32>, vector<8x512xf32>, vector<8x512xf32>, vector<8x512xf32>, vector<8x512xf32>, vector<8x512xf32>, vector<8x512xf32>, vector<8x512xf32>, vector<8x512xf32> -> vector<72x512xf32>
    %c0_59 = arith.constant 0 : index
    %c0_60 = arith.constant 0 : index
    %105 = vector.load %arg7[%c0_59, %c0_60] : memref<8x72xf32, #tpu.memory_space<vmem>>, vector<8x72xf32>
    %cst_61 = arith.constant dense<0.000000e+00> : vector<8x512xf32>
    %106 = tpu.matmul %105, %104, %cst_61 {dimension_numbers = #tpu.dot_dimension_numbers<[1], [0], [0], [1], [0, 0, 1, 1], [], []>} : vector<8x72xf32>, vector<72x512xf32>, vector<8x512xf32> -> vector<8x512xf32>
    %c0_62 = arith.constant 0 : index
    %c0_63 = arith.constant 0 : index
    %107 = vector.load %arg8[%c0_62, %c0_63] : memref<8x1xf32, #tpu.memory_space<vmem>>, vector<8x1xf32>
    %108 = vector.broadcast %107 : vector<8x1xf32> to vector<8x512xf32>
    %109 = arith.addf %106, %108 : vector<8x512xf32>
    %c0_64 = arith.constant 0 : index
    %c0_65 = arith.constant 0 : index
    %110 = vector.load %arg9[%c0_64, %c0_65] : memref<8x512xf32, #tpu.memory_space<vmem>>, vector<8x512xf32>
    tpu.vector_store %arg9[%c0_64, %c0_65], %109 {strides = array<i32>} : memref<8x512xf32, #tpu.memory_space<vmem>>, vector<8x512xf32>,
    return
  }
  func.func @transform_0(%arg0: i32) -> (i32, i32) {
    %c0_i32 = arith.constant 0 : i32
    %c0_i32_0 = arith.constant 0 : i32
    %c0_i32_1 = arith.constant 0 : i32
    return %c0_i32, %c0_i32_0 : i32, i32
  }
  func.func @transform_1(%arg0: i32) -> (i32, i32) {
    %c0_i32 = arith.constant 0 : i32
    %c0_i32_0 = arith.constant 0 : i32
    %c0_i32_1 = arith.constant 0 : i32
    return %c0_i32, %c0_i32_0 : i32, i32
  }
  func.func @transform_2(%arg0: i32) -> (i32, i32) {
    %c0_i32 = arith.constant 0 : i32
    %c0_i32_0 = arith.constant 0 : i32
    %c0_i32_1 = arith.constant 0 : i32
    return %c0_i32, %c0_i32_0 : i32, i32
  }
  func.func @transform_3(%arg0: i32) -> (i32, i32) {
    %c0_i32 = arith.constant 0 : i32
    %c0_i32_0 = arith.constant 0 : i32
    %c0_i32_1 = arith.constant 0 : i32
    return %c0_i32, %c0_i32_0 : i32, i32
  }
  func.func @transform_4(%arg0: i32) -> (i32, i32) {
    %c0_i32 = arith.constant 0 : i32
    %c0_i32_0 = arith.constant 0 : i32
    %c0_i32_1 = arith.constant 0 : i32
    return %c0_i32, %c0_i32_0 : i32, i32
  }
  func.func @transform_5(%arg0: i32) -> (i32, i32) {
    %c0_i32 = arith.constant 0 : i32
    %c0_i32_0 = arith.constant 0 : i32
    %c0_i32_1 = arith.constant 0 : i32
    return %c0_i32, %c0_i32_0 : i32, i32
  }
  func.func @transform_6(%arg0: i32) -> (i32, i32) {
    %c0_i32 = arith.constant 0 : i32
    %c0_i32_0 = arith.constant 0 : i32
    %c0_i32_1 = arith.constant 0 : i32
    return %c0_i32, %c0_i32_0 : i32, i32
  }
  func.func @transform_7(%arg0: i32) -> (i32, i32) {
    %c0_i32 = arith.constant 0 : i32
    %c0_i32_0 = arith.constant 0 : i32
    %c0_i32_1 = arith.constant 0 : i32
    return %c0_i32, %c0_i32_0 : i32, i32
  }
  func.func @transform_8(%arg0: i32) -> (i32, i32) {
    %c0_i32 = arith.constant 0 : i32
    %c0_i32_0 = arith.constant 0 : i32
    %c0_i32_1 = arith.constant 0 : i32
    return %c0_i32, %c0_i32_0 : i32, i32
  }
}

</mosaic_0001>

<llo_original>
// kernel: marked_cnn_forward.1
$region0: #{marked_cnn_forward.1}
  #allocation0 [shape = 'u32[]', space=smem, size = 0x4, offset = 0x4, fixed_abs, tag = 'smem constant byte address 0x4 - core index']
  #allocation1 [shape = 'u32[144,128]{1,0:T(1,128)}', space=vmem, size = 0x12000, scoped, tag = 'internal scratch']
  #allocation2 [shape = 'f32[8,512]{1,0:T(8,128)}', space=vmem, size = 0x4000, scoped, tag = 'scratch operand']
  %s0 = inlined_call_operand.vmem [shape: f32[4,512], index: 0, kind: input, shape index: {}]
  %s1 = inlined_call_operand.vmem [shape: f32[1,512], index: 1, kind: input, shape index: {}]
  %s2 = inlined_call_operand.vmem [shape: s32[1,512], index: 2, kind: input, shape index: {}]
  %s3 = inlined_call_operand.vmem [shape: s32[1,512], index: 3, kind: input, shape index: {}]
  %s4 = inlined_call_operand.vmem [shape: f32[8,72], index: 4, kind: input, shape index: {}]
  %s5 = inlined_call_operand.vmem [shape: f32[8,1], index: 5, kind: input, shape index: {}]
  %s6 = inlined_call_operand.vmem [shape: f32[8,72], index: 6, kind: input, shape index: {}]
  %s7 = inlined_call_operand.vmem [shape: f32[8,1], index: 7, kind: input, shape index: {}]
  %s8 = inlined_call_operand.vmem [shape: f32[8,512], index: 8, kind: output, shape index: {}]
  %s9 = sld [smem:[#allocation0]]
  $region42: #{marked_cnn_forward.1} parent=0
    _
  %s11 = ssub.s32 1, %s9
  %s12 = scalar_select 0, %s11, %s9
  // Predicated region
  $region2: #{marked_cnn_forward.1} parent=0 // pred_check
    _
  $region3: #{marked_cnn_forward.1} parent=0 // pred_check_branch
    %14 = sbr.rel (0) target = $region5
  $region4: #{marked_cnn_forward.1} parent=0 // pred_region
    _
  $region5: #{marked_cnn_forward.1} parent=0 // pred_fallthru
    _
  // Predicated region
  $region6: #{marked_cnn_forward.1} parent=0 // pred_check
    _
  $region7: #{marked_cnn_forward.1} parent=0 // pred_check_branch
    %16 = sbr.rel (0) target = $region9
  $region8: #{marked_cnn_forward.1} parent=0 // pred_region
    _
  $region9: #{marked_cnn_forward.1} parent=0 // pred_fallthru
    _
  // Predicated region
  $region10: #{marked_cnn_forward.1} parent=0 // pred_check
    _
  $region11: #{marked_cnn_forward.1} parent=0 // pred_check_branch
    %18 = sbr.rel (0) target = $region13
  $region12: #{marked_cnn_forward.1} parent=0 // pred_region
    _
  $region13: #{marked_cnn_forward.1} parent=0 // pred_fallthru
    _
  // Predicated region
  $region14: #{marked_cnn_forward.1} parent=0 // pred_check
    _
  $region15: #{marked_cnn_forward.1} parent=0 // pred_check_branch
    %20 = sbr.rel (0) target = $region17
  $region16: #{marked_cnn_forward.1} parent=0 // pred_region
    _
  $region17: #{marked_cnn_forward.1} parent=0 // pred_fallthru
    _
  // Predicated region
  $region18: #{marked_cnn_forward.1} parent=0 // pred_check
    _
  $region19: #{marked_cnn_forward.1} parent=0 // pred_check_branch
    %22 = sbr.rel (0) target = $region21
  $region20: #{marked_cnn_forward.1} parent=0 // pred_region
    _
  $region21: #{marked_cnn_forward.1} parent=0 // pred_fallthru
    _
  // Predicated region
  $region22: #{marked_cnn_forward.1} parent=0 // pred_check
    _
  $region23: #{marked_cnn_forward.1} parent=0 // pred_check_branch
    %24 = sbr.rel (0) target = $region25
  $region24: #{marked_cnn_forward.1} parent=0 // pred_region
    _
  $region25: #{marked_cnn_forward.1} parent=0 // pred_fallthru
    _
  // Predicated region
  $region26: #{marked_cnn_forward.1} parent=0 // pred_check
    _
  $region27: #{marked_cnn_forward.1} parent=0 // pred_check_branch
    %26 = sbr.rel (0) target = $region29
  $region28: #{marked_cnn_forward.1} parent=0 // pred_region
    _
  $region29: #{marked_cnn_forward.1} parent=0 // pred_fallthru
    _
  // Predicated region
  $region30: #{marked_cnn_forward.1} parent=0 // pred_check
    _
  $region31: #{marked_cnn_forward.1} parent=0 // pred_check_branch
    %28 = sbr.rel (0) target = $region33
  $region32: #{marked_cnn_forward.1} parent=0 // pred_region
    _
  $region33: #{marked_cnn_forward.1} parent=0 // pred_fallthru
    _
  %29 = vst [vmem:[#allocation2] sm:$0xff] 0.0
  %30 = vst [vmem:[#allocation2 + $0x8] sm:$0xff] 0.0
  %31 = vst [vmem:[#allocation2 + $0x10] sm:$0xff] 0.0
  %32 = vst [vmem:[#allocation2 + $0x18] sm:$0xff] 0.0
  %v33 = vld [vmem:[%s0] sm:$0xff]
  %v34 = vld [vmem:[%s0 + $0x8] sm:$0xff]
  %v37 = vcombine.high %v33, %v33
  %v38 = vcombine.high %v34, %v34
  %41 = vst [vmem:[#allocation2] sm:$0xf] %v33
  %42 = vst [vmem:[#allocation2 + $0x8] sm:$0xf] %v37
  %43 = vst [vmem:[#allocation2 + $0x10] sm:$0xf] %v34
  %44 = vst [vmem:[#allocation2 + $0x18] sm:$0xf] %v38
  %v45 = vld [vmem:[%s1] sm:$0xf]
  %v46 = vlaneseq
  %vm47 = vcmp.ge.s32.totalorder %v46, 0
  %vm48 = vcmp.lt.s32.totalorder %v46, 512
  %vm49 = vmand %vm47, %vm48
  %s50 = scalar_lea.vmem [#allocation2], 4
  %51 = vst.msk [vmem:[%s50] ss:$8 sm:$0xf] %vm49, %v45
  %52 = vst.msk [vmem:[%s50] ss:$8 sm:$0x0] %vm49, %v45
  %v53 = vld [vmem:[#allocation2] sm:$0xff]
  %v54 = vld [vmem:[#allocation2 + $0x8] sm:$0xff]
  %v55 = vld [vmem:[#allocation2 + $0x10] sm:$0xff]
  %v56 = vld [vmem:[#allocation2 + $0x18] sm:$0xff]
  %v57 = vld [vmem:[%s2] sm:$0xf]
  %v58 = vld [vmem:[%s3] sm:$0xf]
  %v59 = vlaneseq
  %v60 = vshrl.u32 %v59, 7
  %v61 = vsub.s32 0, %v60
  %v62 = vrot.slane %v57, %v61
  %v63 = vlaneseq
  %v64 = vshrl.u32 %v63, 7
  %v65 = vsub.s32 1, %v64
  %v66 = vrot.slane %v57, %v65
  %v67 = vlaneseq
  %v68 = vshrl.u32 %v67, 7
  %v69 = vsub.s32 2, %v68
  %v70 = vrot.slane %v57, %v69
  %v71 = vlaneseq
  %v72 = vshrl.u32 %v71, 7
  %v73 = vsub.s32 3, %v72
  %v74 = vrot.slane %v57, %v73
  %v75 = vlaneseq
  %v76 = vshrl.u32 %v75, 7
  %v77 = vsub.s32 0, %v76
  %v78 = vrot.slane %v58, %v77
  %v79 = vlaneseq
  %v80 = vshrl.u32 %v79, 7
  %v81 = vsub.s32 1, %v80
  %v82 = vrot.slane %v58, %v81
  %v83 = vlaneseq
  %v84 = vshrl.u32 %v83, 7
  %v85 = vsub.s32 2, %v84
  %v86 = vrot.slane %v58, %v85
  %v87 = vlaneseq
  %v88 = vshrl.u32 %v87, 7
  %v89 = vsub.s32 3, %v88
  %v90 = vrot.slane %v58, %v89
  %vm91 = vcmp.lt.s32.totalorder %v78, 1
  %vm92 = vcmp.lt.s32.totalorder %v82, 1
  %vm93 = vcmp.lt.s32.totalorder %v86, 1
  %vm94 = vcmp.lt.s32.totalorder %v90, 1
  %95 = vrot.lane.b32.xlu0 %v53, 16
  %v96 = vpop.permute.xlu0 %95
  %97 = vrot.lane.b32.xlu0 %v54, 16
  %v98 = vpop.permute.xlu0 %97
  %99 = vrot.lane.b32.xlu0 %v55, 16
  %v100 = vpop.permute.xlu0 %99
  %101 = vrot.lane.b32.xlu0 %v56, 16
  %v102 = vpop.permute.xlu0 %101
  %v103 = vlaneseq
  %v104 = vand.u32 %v103, 127
  %vm105 = vcmp.lt.s32.totalorder %v104, 16
  %v106 = vsel %vm105, %v100, %v102
  %v107 = vsel %vm105, %v98, %v100
  %v108 = vsel %vm105, %v96, %v98
  %v109 = vsel %vm105, %v102, %v96
  %v110 = vsel %vm91, %v107, %v109
  %v111 = vsel %vm92, %v106, %v108
  %v112 = vsel %vm93, %v109, %v107
  %v113 = vsel %vm94, %v108, %v106
  %vm114 = vcmp.lt.s32.totalorder %v62, 1
  %vm115 = vcmp.lt.s32.totalorder %v66, 1
  %vm116 = vcmp.lt.s32.totalorder %v70, 1
  %vm117 = vcmp.lt.s32.totalorder %v74, 1
  %118 = vrot.lane.b32.xlu0 %v110, 1
  %v119 = vpop.permute.xlu0 %118
  %120 = vrot.lane.b32.xlu0 %v111, 1
  %v121 = vpop.permute.xlu0 %120
  %122 = vrot.lane.b32.xlu0 %v112, 1
  %v123 = vpop.permute.xlu0 %122
  %124 = vrot.lane.b32.xlu0 %v113, 1
  %v125 = vpop.permute.xlu0 %124
  %vm126 = vcmp.lt.s32.totalorder %v104, 1
  %v127 = vsel %vm126, %v123, %v125
  %v128 = vsel %vm126, %v121, %v123
  %v129 = vsel %vm126, %v119, %v121
  %v130 = vsel %vm126, %v125, %v119
  %131 = vrot.lane.b32.xlu0 %v110, 113
  %v132 = vpop.permute.xlu0 %131
  %133 = vrot.lane.b32.xlu0 %v111, 113
  %v134 = vpop.permute.xlu0 %133
  %135 = vrot.lane.b32.xlu0 %v112, 113
  %v136 = vpop.permute.xlu0 %135
  %137 = vrot.lane.b32.xlu0 %v113, 113
  %v138 = vpop.permute.xlu0 %137
  %vm139 = vcmp.lt.s32.totalorder %v104, 113
  %v140 = vsel %vm139, %v136, %v138
  %v141 = vsel %vm139, %v134, %v136
  %v142 = vsel %vm139, %v132, %v134
  %v143 = vsel %vm139, %v138, %v132
  %v144 = vsel %vm114, %v142, %v130
  %v145 = vsel %vm115, %v141, %v129
  %v146 = vsel %vm116, %v140, %v128
  %v147 = vsel %vm117, %v143, %v127
  %vm148 = vcmp.ge.s32.totalorder %v62, 15
  %vm149 = vcmp.ge.s32.totalorder %v66, 15
  %vm150 = vcmp.ge.s32.totalorder %v70, 15
  %vm151 = vcmp.ge.s32.totalorder %v74, 15
  %152 = vrot.lane.b32.xlu0 %v110, 127
  %v153 = vpop.permute.xlu0 %152
  %154 = vrot.lane.b32.xlu0 %v111, 127
  %v155 = vpop.permute.xlu0 %154
  %156 = vrot.lane.b32.xlu0 %v112, 127
  %v157 = vpop.permute.xlu0 %156
  %158 = vrot.lane.b32.xlu0 %v113, 127
  %v159 = vpop.permute.xlu0 %158
  %vm160 = vcmp.lt.s32.totalorder %v104, 127
  %v161 = vsel %vm160, %v157, %v159
  %v162 = vsel %vm160, %v155, %v157
  %v163 = vsel %vm160, %v153, %v155
  %v164 = vsel %vm160, %v159, %v153
  %165 = vrot.lane.b32.xlu0 %v110, 15
  %v166 = vpop.permute.xlu0 %165
  %167 = vrot.lane.b32.xlu0 %v111, 15
  %v168 = vpop.permute.xlu0 %167
  %169 = vrot.lane.b32.xlu0 %v112, 15
  %v170 = vpop.permute.xlu0 %169
  %171 = vrot.lane.b32.xlu0 %v113, 15
  %v172 = vpop.permute.xlu0 %171
  %vm173 = vcmp.lt.s32.totalorder %v104, 15
  %v174 = vsel %vm173, %v170, %v172
  %v175 = vsel %vm173, %v168, %v170
  %v176 = vsel %vm173, %v166, %v168
  %v177 = vsel %vm173, %v172, %v166
  %v178 = vsel %vm148, %v177, %v163
  %v179 = vsel %vm149, %v176, %v162
  %v180 = vsel %vm150, %v175, %v161
  %v181 = vsel %vm151, %v174, %v164
  %182 = vrot.lane.b32.xlu0 %v53, 1
  %v183 = vpop.permute.xlu0 %182
  %184 = vrot.lane.b32.xlu0 %v54, 1
  %v185 = vpop.permute.xlu0 %184
  %186 = vrot.lane.b32.xlu0 %v55, 1
  %v187 = vpop.permute.xlu0 %186
  %188 = vrot.lane.b32.xlu0 %v56, 1
  %v189 = vpop.permute.xlu0 %188
  %v190 = vsel %vm126, %v187, %v189
  %v191 = vsel %vm126, %v185, %v187
  %v192 = vsel %vm126, %v183, %v185
  %v193 = vsel %vm126, %v189, %v183
  %194 = vrot.lane.b32.xlu0 %v53, 113
  %v195 = vpop.permute.xlu0 %194
  %196 = vrot.lane.b32.xlu0 %v54, 113
  %v197 = vpop.permute.xlu0 %196
  %198 = vrot.lane.b32.xlu0 %v55, 113
  %v199 = vpop.permute.xlu0 %198
  %200 = vrot.lane.b32.xlu0 %v56, 113
  %v201 = vpop.permute.xlu0 %200
  %v202 = vsel %vm139, %v199, %v201
  %v203 = vsel %vm139, %v197, %v199
  %v204 = vsel %vm139, %v195, %v197
  %v205 = vsel %vm139, %v201, %v195
  %v206 = vsel %vm114, %v204, %v193
  %v207 = vsel %vm115, %v203, %v192
  %v208 = vsel %vm116, %v202, %v191
  %v209 = vsel %vm117, %v205, %v190
  %210 = vrot.lane.b32.xlu0 %v53, 127
  %v211 = vpop.permute.xlu0 %210
  %212 = vrot.lane.b32.xlu0 %v54, 127
  %v213 = vpop.permute.xlu0 %212
  %214 = vrot.lane.b32.xlu0 %v55, 127
  %v215 = vpop.permute.xlu0 %214
  %216 = vrot.lane.b32.xlu0 %v56, 127
  %v217 = vpop.permute.xlu0 %216
  %v218 = vsel %vm160, %v215, %v217
  %v219 = vsel %vm160, %v213, %v215
  %v220 = vsel %vm160, %v211, %v213
  %v221 = vsel %vm160, %v217, %v211
  %222 = vrot.lane.b32.xlu0 %v53, 15
  %v223 = vpop.permute.xlu0 %222
  %224 = vrot.lane.b32.xlu0 %v54, 15
  %v225 = vpop.permute.xlu0 %224
  %226 = vrot.lane.b32.xlu0 %v55, 15
  %v227 = vpop.permute.xlu0 %226
  %228 = vrot.lane.b32.xlu0 %v56, 15
  %v229 = vpop.permute.xlu0 %228
  %v230 = vsel %vm173, %v227, %v229
  %v231 = vsel %vm173, %v225, %v227
  %v232 = vsel %vm173, %v223, %v225
  %v233 = vsel %vm173, %v229, %v223
  %v234 = vsel %vm148, %v233, %v220
  %v235 = vsel %vm149, %v232, %v219
  %v236 = vsel %vm150, %v231, %v218
  %v237 = vsel %vm151, %v230, %v221
  %vm238 = vcmp.ge.s32.totalorder %v78, 15
  %vm239 = vcmp.ge.s32.totalorder %v82, 15
  %vm240 = vcmp.ge.s32.totalorder %v86, 15
  %vm241 = vcmp.ge.s32.totalorder %v90, 15
  %242 = vrot.lane.b32.xlu0 %v53, 112
  %v243 = vpop.permute.xlu0 %242
  %244 = vrot.lane.b32.xlu0 %v54, 112
  %v245 = vpop.permute.xlu0 %244
  %246 = vrot.lane.b32.xlu0 %v55, 112
  %v247 = vpop.permute.xlu0 %246
  %248 = vrot.lane.b32.xlu0 %v56, 112
  %v249 = vpop.permute.xlu0 %248
  %vm250 = vcmp.lt.s32.totalorder %v104, 112
  %v251 = vsel %vm250, %v247, %v249
  %v252 = vsel %vm250, %v245, %v247
  %v253 = vsel %vm250, %v243, %v245
  %v254 = vsel %vm250, %v249, %v243
  %v255 = vsel %vm238, %v251, %v253
  %v256 = vsel %vm239, %v254, %v252
  %v257 = vsel %vm240, %v253, %v251
  %v258 = vsel %vm241, %v252, %v254
  %259 = vrot.lane.b32.xlu0 %v255, 1
  %v260 = vpop.permute.xlu0 %259
  %261 = vrot.lane.b32.xlu0 %v256, 1
  %v262 = vpop.permute.xlu0 %261
  %263 = vrot.lane.b32.xlu0 %v257, 1
  %v264 = vpop.permute.xlu0 %263
  %265 = vrot.lane.b32.xlu0 %v258, 1
  %v266 = vpop.permute.xlu0 %265
  %v267 = vsel %vm126, %v264, %v266
  %v268 = vsel %vm126, %v262, %v264
  %v269 = vsel %vm126, %v260, %v262
  %v270 = vsel %vm126, %v266, %v260
  %271 = vrot.lane.b32.xlu0 %v255, 113
  %v272 = vpop.permute.xlu0 %271
  %273 = vrot.lane.b32.xlu0 %v256, 113
  %v274 = vpop.permute.xlu0 %273
  %275 = vrot.lane.b32.xlu0 %v257, 113
  %v276 = vpop.permute.xlu0 %275
  %277 = vrot.lane.b32.xlu0 %v258, 113
  %v278 = vpop.permute.xlu0 %277
  %v279 = vsel %vm139, %v276, %v278
  %v280 = vsel %vm139, %v274, %v276
  %v281 = vsel %vm139, %v272, %v274
  %v282 = vsel %vm139, %v278, %v272
  %v283 = vsel %vm114, %v281, %v270
  %v284 = vsel %vm115, %v280, %v269
  %v285 = vsel %vm116, %v279, %v268
  %v286 = vsel %vm117, %v282, %v267
  %287 = vrot.lane.b32.xlu0 %v255, 127
  %v288 = vpop.permute.xlu0 %287
  %289 = vrot.lane.b32.xlu0 %v256, 127
  %v290 = vpop.permute.xlu0 %289
  %291 = vrot.lane.b32.xlu0 %v257, 127
  %v292 = vpop.permute.xlu0 %291
  %293 = vrot.lane.b32.xlu0 %v258, 127
  %v294 = vpop.permute.xlu0 %293
  %v295 = vsel %vm160, %v292, %v294
  %v296 = vsel %vm160, %v290, %v292
  %v297 = vsel %vm160, %v288, %v290
  %v298 = vsel %vm160, %v294, %v288
  %299 = vrot.lane.b32.xlu0 %v255, 15
  %v300 = vpop.permute.xlu0 %299
  %301 = vrot.lane.b32.xlu0 %v256, 15
  %v302 = vpop.permute.xlu0 %301
  %303 = vrot.lane.b32.xlu0 %v257, 15
  %v304 = vpop.permute.xlu0 %303
  %305 = vrot.lane.b32.xlu0 %v258, 15
  %v306 = vpop.permute.xlu0 %305
  %v307 = vsel %vm173, %v304, %v306
  %v308 = vsel %vm173, %v302, %v304
  %v309 = vsel %vm173, %v300, %v302
  %v310 = vsel %vm173, %v306, %v300
  %v311 = vsel %vm148, %v310, %v297
  %v312 = vsel %vm149, %v309, %v296
  %v313 = vsel %vm150, %v308, %v295
  %v314 = vsel %vm151, %v307, %v298
  %v315 = vld [vmem:[%s4] sm:$0xff]
  %v316 = vld [vmem:[%s5] sm:$0xff]
  %318 = vset.pattern.permute.xlu0 0
  %319 = vperm.xlu0 %318, %v316
  %v320 = vpop.permute.xlu0 %319
  %vm322 = vcmask 588800
  %v324 = vsel %vm322, %v315, 0
  %326 = vmatprep.subr.mxu0 %v145
  %327 = vmatpush1.msra.mxu0 %v144
  %328 = vmatprep.subr.mxu0 %v111
  %329 = vmatpush1.msra.mxu0 %v110
  %330 = vmatprep.subr.mxu0 %v179
  %331 = vmatpush1.msra.mxu0 %v178
  %332 = vmatprep.subr.mxu0 %v207
  %333 = vmatpush1.msra.mxu0 %v206
  %334 = vmatprep.subr.mxu0 %v54
  %335 = vmatpush1.msra.mxu0 %v53
  %336 = vmatprep.subr.mxu0 %v235
  %337 = vmatpush1.msra.mxu0 %v234
  %338 = vmatprep.subr.mxu0 %v284
  %339 = vmatpush1.msra.mxu0 %v283
  %340 = vmatprep.subr.mxu0 %v256
  %341 = vmatpush1.msra.mxu0 %v255
  %342 = vmatprep.subr.mxu0 %v312
  %343 = vmatpush1.msra.mxu0 %v311
  %344 = vmatprep.subr.mxu0 0.0
  %345 = vmatpush1.msra.mxu0 0.0
  %346 = vmatprep.subr.mxu0 0.0
  %347 = vmatpush1.msra.mxu0 0.0
  %348 = vmatprep.subr.mxu0 0.0
  %349 = vmatpush1.msra.mxu0 0.0
  %350 = vmatprep.subr.mxu0 0.0
  %351 = vmatpush1.msra.mxu0 0.0
  %352 = vmatprep.subr.mxu0 0.0
  %353 = vmatpush1.msra.mxu0 0.0
  %354 = vmatprep.subr.mxu0 0.0
  %355 = vmatpush1.msra.mxu0 0.0
  %356 = vmatprep.subr.mxu0 0.0
  %357 = vmatpush1.msra.mxu0 0.0
  %358 = vmatprep.subr.mxu0 0.0
  %359 = vmatpush1.msra.mxu0 0.0
  %360 = vmatprep.subr.mxu0 0.0
  %361 = vmatpush1.msra.mxu0 0.0
  %362 = vmatprep.subr.mxu0 0.0
  %363 = vmatpush1.msra.mxu0 0.0
  %364 = vmatprep.subr.mxu0 0.0
  %365 = vmatpush1.msra.mxu0 0.0
  %366 = vmatprep.subr.mxu0 0.0
  %367 = vmatpush1.msra.mxu0 0.0
  %368 = vmatprep.subr.mxu0 0.0
  %369 = vmatpush1.msra.mxu0 0.0
  %370 = vmatprep.subr.mxu0 0.0
  %371 = vmatpush1.msra.mxu0 0.0
  %372 = vmatprep.subr.mxu0 0.0
  %373 = vmatpush1.msra.mxu0 0.0
  %374 = vmatprep.subr.mxu0 0.0
  %375 = vmatpush1.msra.mxu0 0.0
  %376 = vmatprep.subr.mxu0 0.0
  %377 = vmatpush1.msra.mxu0 0.0
  %378 = vmatprep.subr.mxu0 0.0
  %379 = vmatpush1.msra.mxu0 0.0
  %380 = vmatprep.subr.mxu0 0.0
  %381 = vmatpush1.msra.mxu0 0.0
  %382 = vmatprep.subr.mxu0 0.0
  %383 = vmatpush1.msra.mxu0 0.0
  %384 = vmatprep.subr.mxu0 0.0
  %385 = vmatpush1.msra.mxu0 0.0
  %386 = vmatprep.subr.mxu0 0.0
  %387 = vmatpush1.msra.mxu0 0.0
  %388 = vmatprep.subr.mxu0 0.0
  %389 = vmatpush1.msra.mxu0 0.0
  %390 = vmatprep.mubr.f32.mxu0 0.0
  %391 = vmatmul.mubr.f32.gmra.mrb[0].mxu0 %v324
  %v392 = vpop.f32.mrb[0].mxu0
  %v393 = vadd.f32 %v320, %v392
  %v394 = vpop.f32.mrb[0].mxu0
  %v395 = vadd.f32 %v320, %v394
  %396 = vdwg.mxu0
  %397 = vmatprep.subr.mxu0 %v147
  %398 = vmatpush1.msra.mxu0 %v146
  %399 = vmatprep.subr.mxu0 %v113
  %400 = vmatpush1.msra.mxu0 %v112
  %401 = vmatprep.subr.mxu0 %v181
  %402 = vmatpush1.msra.mxu0 %v180
  %403 = vmatprep.subr.mxu0 %v209
  %404 = vmatpush1.msra.mxu0 %v208
  %405 = vmatprep.subr.mxu0 %v56
  %406 = vmatpush1.msra.mxu0 %v55
  %407 = vmatprep.subr.mxu0 %v237
  %408 = vmatpush1.msra.mxu0 %v236
  %409 = vmatprep.subr.mxu0 %v286
  %410 = vmatpush1.msra.mxu0 %v285
  %411 = vmatprep.subr.mxu0 %v258
  %412 = vmatpush1.msra.mxu0 %v257
  %413 = vmatprep.subr.mxu0 %v314
  %414 = vmatpush1.msra.mxu0 %v313
  %415 = vmatprep.subr.mxu0 0.0
  %416 = vmatpush1.msra.mxu0 0.0
  %417 = vmatprep.subr.mxu0 0.0
  %418 = vmatpush1.msra.mxu0 0.0
  %419 = vmatprep.subr.mxu0 0.0
  %420 = vmatpush1.msra.mxu0 0.0
  %421 = vmatprep.subr.mxu0 0.0
  %422 = vmatpush1.msra.mxu0 0.0
  %423 = vmatprep.subr.mxu0 0.0
  %424 = vmatpush1.msra.mxu0 0.0
  %425 = vmatprep.subr.mxu0 0.0
  %426 = vmatpush1.msra.mxu0 0.0
  %427 = vmatprep.subr.mxu0 0.0
  %428 = vmatpush1.msra.mxu0 0.0
  %429 = vmatprep.subr.mxu0 0.0
  %430 = vmatpush1.msra.mxu0 0.0
  %431 = vmatprep.subr.mxu0 0.0
  %432 = vmatpush1.msra.mxu0 0.0
  %433 = vmatprep.subr.mxu0 0.0
  %434 = vmatpush1.msra.mxu0 0.0
  %435 = vmatprep.subr.mxu0 0.0
  %436 = vmatpush1.msra.mxu0 0.0
  %437 = vmatprep.subr.mxu0 0.0
  %438 = vmatpush1.msra.mxu0 0.0
  %439 = vmatprep.subr.mxu0 0.0
  %440 = vmatpush1.msra.mxu0 0.0
  %441 = vmatprep.subr.mxu0 0.0
  %442 = vmatpush1.msra.mxu0 0.0
  %443 = vmatprep.subr.mxu0 0.0
  %444 = vmatpush1.msra.mxu0 0.0
  %445 = vmatprep.subr.mxu0 0.0
  %446 = vmatpush1.msra.mxu0 0.0
  %447 = vmatprep.subr.mxu0 0.0
  %448 = vmatpush1.msra.mxu0 0.0
  %449 = vmatprep.subr.mxu0 0.0
  %450 = vmatpush1.msra.mxu0 0.0
  %451 = vmatprep.subr.mxu0 0.0
  %452 = vmatpush1.msra.mxu0 0.0
  %453 = vmatprep.subr.mxu0 0.0
  %454 = vmatpush1.msra.mxu0 0.0
  %455 = vmatprep.subr.mxu0 0.0
  %456 = vmatpush1.msra.mxu0 0.0
  %457 = vmatprep.subr.mxu0 0.0
  %458 = vmatpush1.msra.mxu0 0.0
  %459 = vmatprep.subr.mxu0 0.0
  %460 = vmatpush1.msra.mxu0 0.0
  %461 = vmatprep.mubr.f32.mxu0 0.0
  %462 = vmatmul.mubr.f32.gmra.mrb[0].mxu0 %v324
  %v463 = vpop.f32.mrb[0].mxu0
  %v464 = vadd.f32 %v320, %v463
  %v465 = vpop.f32.mrb[0].mxu0
  %v466 = vadd.f32 %v320, %v465
  %467 = vdwg.mxu0
  %v468 = vtanh.pop %v393
  %v469 = vtanh.pop %v395
  %v470 = vtanh.pop %v464
  %v471 = vtanh.pop %v466
  %472 = vrot.lane.b32.xlu0 %v468, 16
  %v473 = vpop.permute.xlu0 %472
  %474 = vrot.lane.b32.xlu0 %v469, 16
  %v475 = vpop.permute.xlu0 %474
  %476 = vrot.lane.b32.xlu0 %v470, 16
  %v477 = vpop.permute.xlu0 %476
  %478 = vrot.lane.b32.xlu0 %v471, 16
  %v479 = vpop.permute.xlu0 %478
  %v480 = vsel %vm105, %v477, %v479
  %v481 = vsel %vm105, %v475, %v477
  %v482 = vsel %vm105, %v473, %v475
  %v483 = vsel %vm105, %v479, %v473
  %v484 = vsel %vm91, %v481, %v483
  %v485 = vsel %vm92, %v480, %v482
  %v486 = vsel %vm93, %v483, %v481
  %v487 = vsel %vm94, %v482, %v480
  %488 = vrot.lane.b32.xlu0 %v484, 1
  %v489 = vpop.permute.xlu0 %488
  %490 = vrot.lane.b32.xlu0 %v485, 1
  %v491 = vpop.permute.xlu0 %490
  %492 = vrot.lane.b32.xlu0 %v486, 1
  %v493 = vpop.permute.xlu0 %492
  %494 = vrot.lane.b32.xlu0 %v487, 1
  %v495 = vpop.permute.xlu0 %494
  %v496 = vsel %vm126, %v493, %v495
  %v497 = vsel %vm126, %v491, %v493
  %v498 = vsel %vm126, %v489, %v491
  %v499 = vsel %vm126, %v495, %v489
  %500 = vrot.lane.b32.xlu0 %v484, 113
  %v501 = vpop.permute.xlu0 %500
  %502 = vrot.lane.b32.xlu0 %v485, 113
  %v503 = vpop.permute.xlu0 %502
  %504 = vrot.lane.b32.xlu0 %v486, 113
  %v505 = vpop.permute.xlu0 %504
  %506 = vrot.lane.b32.xlu0 %v487, 113
  %v507 = vpop.permute.xlu0 %506
  %v508 = vsel %vm139, %v505, %v507
  %v509 = vsel %vm139, %v503, %v505
  %v510 = vsel %vm139, %v501, %v503
  %v511 = vsel %vm139, %v507, %v501
  %v512 = vsel %vm114, %v510, %v499
  %v513 = vsel %vm115, %v509, %v498
  %v514 = vsel %vm116, %v508, %v497
  %v515 = vsel %vm117, %v511, %v496
  %516 = vrot.lane.b32.xlu0 %v484, 127
  %v517 = vpop.permute.xlu0 %516
  %518 = vrot.lane.b32.xlu0 %v485, 127
  %v519 = vpop.permute.xlu0 %518
  %520 = vrot.lane.b32.xlu0 %v486, 127
  %v521 = vpop.permute.xlu0 %520
  %522 = vrot.lane.b32.xlu0 %v487, 127
  %v523 = vpop.permute.xlu0 %522
  %v524 = vsel %vm160, %v521, %v523
  %v525 = vsel %vm160, %v519, %v521
  %v526 = vsel %vm160, %v517, %v519
  %v527 = vsel %vm160, %v523, %v517
  %528 = vrot.lane.b32.xlu0 %v484, 15
  %v529 = vpop.permute.xlu0 %528
  %530 = vrot.lane.b32.xlu0 %v485, 15
  %v531 = vpop.permute.xlu0 %530
  %532 = vrot.lane.b32.xlu0 %v486, 15
  %v533 = vpop.permute.xlu0 %532
  %534 = vrot.lane.b32.xlu0 %v487, 15
  %v535 = vpop.permute.xlu0 %534
  %v536 = vsel %vm173, %v533, %v535
  %v537 = vsel %vm173, %v531, %v533
  %v538 = vsel %vm173, %v529, %v531
  %v539 = vsel %vm173, %v535, %v529
  %v540 = vsel %vm148, %v539, %v526
  %v541 = vsel %vm149, %v538, %v525
  %v542 = vsel %vm150, %v537, %v524
  %v543 = vsel %vm151, %v536, %v527
  %544 = vrot.lane.b32.xlu0 %v468, 1
  %v545 = vpop.permute.xlu0 %544
  %546 = vrot.lane.b32.xlu0 %v469, 1
  %v547 = vpop.permute.xlu0 %546
  %548 = vrot.lane.b32.xlu0 %v470, 1
  %v549 = vpop.permute.xlu0 %548
  %550 = vrot.lane.b32.xlu0 %v471, 1
  %v551 = vpop.permute.xlu0 %550
  %v552 = vsel %vm126, %v549, %v551
  %v553 = vsel %vm126, %v547, %v549
  %v554 = vsel %vm126, %v545, %v547
  %v555 = vsel %vm126, %v551, %v545
  %556 = vrot.lane.b32.xlu0 %v468, 113
  %v557 = vpop.permute.xlu0 %556
  %558 = vrot.lane.b32.xlu0 %v469, 113
  %v559 = vpop.permute.xlu0 %558
  %560 = vrot.lane.b32.xlu0 %v470, 113
  %v561 = vpop.permute.xlu0 %560
  %562 = vrot.lane.b32.xlu0 %v471, 113
  %v563 = vpop.permute.xlu0 %562
  %v564 = vsel %vm139, %v561, %v563
  %v565 = vsel %vm139, %v559, %v561
  %v566 = vsel %vm139, %v557, %v559
  %v567 = vsel %vm139, %v563, %v557
  %v568 = vsel %vm114, %v566, %v555
  %v569 = vsel %vm115, %v565, %v554
  %v570 = vsel %vm116, %v564, %v553
  %v571 = vsel %vm117, %v567, %v552
  %572 = vrot.lane.b32.xlu0 %v468, 127
  %v573 = vpop.permute.xlu0 %572
  %574 = vrot.lane.b32.xlu0 %v469, 127
  %v575 = vpop.permute.xlu0 %574
  %576 = vrot.lane.b32.xlu0 %v470, 127
  %v577 = vpop.permute.xlu0 %576
  %578 = vrot.lane.b32.xlu0 %v471, 127
  %v579 = vpop.permute.xlu0 %578
  %v580 = vsel %vm160, %v577, %v579
  %v581 = vsel %vm160, %v575, %v577
  %v582 = vsel %vm160, %v573, %v575
  %v583 = vsel %vm160, %v579, %v573
  %584 = vrot.lane.b32.xlu0 %v468, 15
  %v585 = vpop.permute.xlu0 %584
  %586 = vrot.lane.b32.xlu0 %v469, 15
  %v587 = vpop.permute.xlu0 %586
  %588 = vrot.lane.b32.xlu0 %v470, 15
  %v589 = vpop.permute.xlu0 %588
  %590 = vrot.lane.b32.xlu0 %v471, 15
  %v591 = vpop.permute.xlu0 %590
  %v592 = vsel %vm173, %v589, %v591
  %v593 = vsel %vm173, %v587, %v589
  %v594 = vsel %vm173, %v585, %v587
  %v595 = vsel %vm173, %v591, %v585
  %v596 = vsel %vm148, %v595, %v582
  %v597 = vsel %vm149, %v594, %v581
  %v598 = vsel %vm150, %v593, %v580
  %v599 = vsel %vm151, %v592, %v583
  %600 = vrot.lane.b32.xlu0 %v468, 112
  %v601 = vpop.permute.xlu0 %600
  %602 = vrot.lane.b32.xlu0 %v469, 112
  %v603 = vpop.permute.xlu0 %602
  %604 = vrot.lane.b32.xlu0 %v470, 112
  %v605 = vpop.permute.xlu0 %604
  %606 = vrot.lane.b32.xlu0 %v471, 112
  %v607 = vpop.permute.xlu0 %606
  %v608 = vsel %vm250, %v605, %v607
  %v609 = vsel %vm250, %v603, %v605
  %v610 = vsel %vm250, %v601, %v603
  %v611 = vsel %vm250, %v607, %v601
  %v612 = vsel %vm238, %v608, %v610
  %v613 = vsel %vm239, %v611, %v609
  %v614 = vsel %vm240, %v610, %v608
  %v615 = vsel %vm241, %v609, %v611
  %616 = vrot.lane.b32.xlu0 %v612, 1
  %v617 = vpop.permute.xlu0 %616
  %618 = vrot.lane.b32.xlu0 %v613, 1
  %v619 = vpop.permute.xlu0 %618
  %620 = vrot.lane.b32.xlu0 %v614, 1
  %v621 = vpop.permute.xlu0 %620
  %622 = vrot.lane.b32.xlu0 %v615, 1
  %v623 = vpop.permute.xlu0 %622
  %v624 = vsel %vm126, %v621, %v623
  %v625 = vsel %vm126, %v619, %v621
  %v626 = vsel %vm126, %v617, %v619
  %v627 = vsel %vm126, %v623, %v617
  %628 = vrot.lane.b32.xlu0 %v612, 113
  %v629 = vpop.permute.xlu0 %628
  %630 = vrot.lane.b32.xlu0 %v613, 113
  %v631 = vpop.permute.xlu0 %630
  %632 = vrot.lane.b32.xlu0 %v614, 113
  %v633 = vpop.permute.xlu0 %632
  %634 = vrot.lane.b32.xlu0 %v615, 113
  %v635 = vpop.permute.xlu0 %634
  %v636 = vsel %vm139, %v633, %v635
  %v637 = vsel %vm139, %v631, %v633
  %v638 = vsel %vm139, %v629, %v631
  %v639 = vsel %vm139, %v635, %v629
  %v640 = vsel %vm114, %v638, %v627
  %v641 = vsel %vm115, %v637, %v626
  %v642 = vsel %vm116, %v636, %v625
  %v643 = vsel %vm117, %v639, %v624
  %644 = vrot.lane.b32.xlu0 %v612, 127
  %v645 = vpop.permute.xlu0 %644
  %646 = vrot.lane.b32.xlu0 %v613, 127
  %v647 = vpop.permute.xlu0 %646
  %648 = vrot.lane.b32.xlu0 %v614, 127
  %v649 = vpop.permute.xlu0 %648
  %650 = vrot.lane.b32.xlu0 %v615, 127
  %v651 = vpop.permute.xlu0 %650
  %v652 = vsel %vm160, %v649, %v651
  %v653 = vsel %vm160, %v647, %v649
  %v654 = vsel %vm160, %v645, %v647
  %v655 = vsel %vm160, %v651, %v645
  %656 = vrot.lane.b32.xlu0 %v612, 15
  %v657 = vpop.permute.xlu0 %656
  %658 = vrot.lane.b32.xlu0 %v613, 15
  %v659 = vpop.permute.xlu0 %658
  %660 = vrot.lane.b32.xlu0 %v614, 15
  %v661 = vpop.permute.xlu0 %660
  %662 = vrot.lane.b32.xlu0 %v615, 15
  %v663 = vpop.permute.xlu0 %662
  %v664 = vsel %vm173, %v661, %v663
  %v665 = vsel %vm173, %v659, %v661
  %v666 = vsel %vm173, %v657, %v659
  %v667 = vsel %vm173, %v663, %v657
  %v668 = vsel %vm148, %v667, %v654
  %v669 = vsel %vm149, %v666, %v653
  %v670 = vsel %vm150, %v665, %v652
  %v671 = vsel %vm151, %v664, %v655
  %v672 = vld [vmem:[%s6] sm:$0xff]
  %v673 = vld [vmem:[%s7] sm:$0xff]
  %675 = vset.pattern.permute.xlu0 0
  %676 = vperm.xlu0 %675, %v673
  %v677 = vpop.permute.xlu0 %676
  %v680 = vsel %vm322, %v672, 0
  %682 = vmatprep.subr.mxu0 %v513
  %683 = vmatpush1.msra.mxu0 %v512
  %684 = vmatprep.subr.mxu0 %v485
  %685 = vmatpush1.msra.mxu0 %v484
  %686 = vmatprep.subr.mxu0 %v541
  %687 = vmatpush1.msra.mxu0 %v540
  %688 = vmatprep.subr.mxu0 %v569
  %689 = vmatpush1.msra.mxu0 %v568
  %690 = vmatprep.subr.mxu0 %v469
  %691 = vmatpush1.msra.mxu0 %v468
  %692 = vmatprep.subr.mxu0 %v597
  %693 = vmatpush1.msra.mxu0 %v596
  %694 = vmatprep.subr.mxu0 %v641
  %695 = vmatpush1.msra.mxu0 %v640
  %696 = vmatprep.subr.mxu0 %v613
  %697 = vmatpush1.msra.mxu0 %v612
  %698 = vmatprep.subr.mxu0 %v669
  %699 = vmatpush1.msra.mxu0 %v668
  %700 = vmatprep.subr.mxu0 0.0
  %701 = vmatpush1.msra.mxu0 0.0
  %702 = vmatprep.subr.mxu0 0.0
  %703 = vmatpush1.msra.mxu0 0.0
  %704 = vmatprep.subr.mxu0 0.0
  %705 = vmatpush1.msra.mxu0 0.0
  %706 = vmatprep.subr.mxu0 0.0
  %707 = vmatpush1.msra.mxu0 0.0
  %708 = vmatprep.subr.mxu0 0.0
  %709 = vmatpush1.msra.mxu0 0.0
  %710 = vmatprep.subr.mxu0 0.0
  %711 = vmatpush1.msra.mxu0 0.0
  %712 = vmatprep.subr.mxu0 0.0
  %713 = vmatpush1.msra.mxu0 0.0
  %714 = vmatprep.subr.mxu0 0.0
  %715 = vmatpush1.msra.mxu0 0.0
  %716 = vmatprep.subr.mxu0 0.0
  %717 = vmatpush1.msra.mxu0 0.0
  %718 = vmatprep.subr.mxu0 0.0
  %719 = vmatpush1.msra.mxu0 0.0
  %720 = vmatprep.subr.mxu0 0.0
  %721 = vmatpush1.msra.mxu0 0.0
  %722 = vmatprep.subr.mxu0 0.0
  %723 = vmatpush1.msra.mxu0 0.0
  %724 = vmatprep.subr.mxu0 0.0
  %725 = vmatpush1.msra.mxu0 0.0
  %726 = vmatprep.subr.mxu0 0.0
  %727 = vmatpush1.msra.mxu0 0.0
  %728 = vmatprep.subr.mxu0 0.0
  %729 = vmatpush1.msra.mxu0 0.0
  %730 = vmatprep.subr.mxu0 0.0
  %731 = vmatpush1.msra.mxu0 0.0
  %732 = vmatprep.subr.mxu0 0.0
  %733 = vmatpush1.msra.mxu0 0.0
  %734 = vmatprep.subr.mxu0 0.0
  %735 = vmatpush1.msra.mxu0 0.0
  %736 = vmatprep.subr.mxu0 0.0
  %737 = vmatpush1.msra.mxu0 0.0
  %738 = vmatprep.subr.mxu0 0.0
  %739 = vmatpush1.msra.mxu0 0.0
  %740 = vmatprep.subr.mxu0 0.0
  %741 = vmatpush1.msra.mxu0 0.0
  %742 = vmatprep.subr.mxu0 0.0
  %743 = vmatpush1.msra.mxu0 0.0
  %744 = vmatprep.subr.mxu0 0.0
  %745 = vmatpush1.msra.mxu0 0.0
  %746 = vmatprep.mubr.f32.mxu0 0.0
  %747 = vmatmul.mubr.f32.gmra.mrb[0].mxu0 %v680
  %v748 = vpop.f32.mrb[0].mxu0
  %v749 = vadd.f32 %v677, %v748
  %v750 = vpop.f32.mrb[0].mxu0
  %v751 = vadd.f32 %v677, %v750
  %752 = vdwg.mxu0
  %753 = vmatprep.subr.mxu0 %v515
  %754 = vmatpush1.msra.mxu0 %v514
  %755 = vmatprep.subr.mxu0 %v487
  %756 = vmatpush1.msra.mxu0 %v486
  %757 = vmatprep.subr.mxu0 %v543
  %758 = vmatpush1.msra.mxu0 %v542
  %759 = vmatprep.subr.mxu0 %v571
  %760 = vmatpush1.msra.mxu0 %v570
  %761 = vmatprep.subr.mxu0 %v471
  %762 = vmatpush1.msra.mxu0 %v470
  %763 = vmatprep.subr.mxu0 %v599
  %764 = vmatpush1.msra.mxu0 %v598
  %765 = vmatprep.subr.mxu0 %v643
  %766 = vmatpush1.msra.mxu0 %v642
  %767 = vmatprep.subr.mxu0 %v615
  %768 = vmatpush1.msra.mxu0 %v614
  %769 = vmatprep.subr.mxu0 %v671
  %770 = vmatpush1.msra.mxu0 %v670
  %771 = vmatprep.subr.mxu0 0.0
  %772 = vmatpush1.msra.mxu0 0.0
  %773 = vmatprep.subr.mxu0 0.0
  %774 = vmatpush1.msra.mxu0 0.0
  %775 = vmatprep.subr.mxu0 0.0
  %776 = vmatpush1.msra.mxu0 0.0
  %777 = vmatprep.subr.mxu0 0.0
  %778 = vmatpush1.msra.mxu0 0.0
  %779 = vmatprep.subr.mxu0 0.0
  %780 = vmatpush1.msra.mxu0 0.0
  %781 = vmatprep.subr.mxu0 0.0
  %782 = vmatpush1.msra.mxu0 0.0
  %783 = vmatprep.subr.mxu0 0.0
  %784 = vmatpush1.msra.mxu0 0.0
  %785 = vmatprep.subr.mxu0 0.0
  %786 = vmatpush1.msra.mxu0 0.0
  %787 = vmatprep.subr.mxu0 0.0
  %788 = vmatpush1.msra.mxu0 0.0
  %789 = vmatprep.subr.mxu0 0.0
  %790 = vmatpush1.msra.mxu0 0.0
  %791 = vmatprep.subr.mxu0 0.0
  %792 = vmatpush1.msra.mxu0 0.0
  %793 = vmatprep.subr.mxu0 0.0
  %794 = vmatpush1.msra.mxu0 0.0
  %795 = vmatprep.subr.mxu0 0.0
  %796 = vmatpush1.msra.mxu0 0.0
  %797 = vmatprep.subr.mxu0 0.0
  %798 = vmatpush1.msra.mxu0 0.0
  %799 = vmatprep.subr.mxu0 0.0
  %800 = vmatpush1.msra.mxu0 0.0
  %801 = vmatprep.subr.mxu0 0.0
  %802 = vmatpush1.msra.mxu0 0.0
  %803 = vmatprep.subr.mxu0 0.0
  %804 = vmatpush1.msra.mxu0 0.0
  %805 = vmatprep.subr.mxu0 0.0
  %806 = vmatpush1.msra.mxu0 0.0
  %807 = vmatprep.subr.mxu0 0.0
  %808 = vmatpush1.msra.mxu0 0.0
  %809 = vmatprep.subr.mxu0 0.0
  %810 = vmatpush1.msra.mxu0 0.0
  %811 = vmatprep.subr.mxu0 0.0
  %812 = vmatpush1.msra.mxu0 0.0
  %813 = vmatprep.subr.mxu0 0.0
  %814 = vmatpush1.msra.mxu0 0.0
  %815 = vmatprep.subr.mxu0 0.0
  %816 = vmatpush1.msra.mxu0 0.0
  %817 = vmatprep.mubr.f32.mxu0 0.0
  %818 = vmatmul.mubr.f32.gmra.mrb[0].mxu0 %v680
  %v819 = vpop.f32.mrb[0].mxu0
  %v820 = vadd.f32 %v677, %v819
  %v821 = vpop.f32.mrb[0].mxu0
  %v822 = vadd.f32 %v677, %v821
  %823 = vdwg.mxu0
  %824 = vst [vmem:[%s8] sm:$0xff] %v749
  %825 = vst [vmem:[%s8 + $0x8] sm:$0xff] %v751
  %826 = vst [vmem:[%s8 + $0x10] sm:$0xff] %v820
  %827 = vst [vmem:[%s8 + $0x18] sm:$0xff] %v822
  // Predicated region
  $region34: #{marked_cnn_forward.1} parent=0 // pred_check
    _
  $region35: #{marked_cnn_forward.1} parent=0 // pred_check_branch
    %829 = sbr.rel (0) target = $region37
  $region36: #{marked_cnn_forward.1} parent=0 // pred_region
    _
  $region37: #{marked_cnn_forward.1} parent=0 // pred_fallthru
    _
  // Predicated region
  $region38: #{marked_cnn_forward.1} parent=0 // pred_check
    _
  $region39: #{marked_cnn_forward.1} parent=0 // pred_check_branch
    %831 = sbr.rel (0) target = $region41
  $region40: #{marked_cnn_forward.1} parent=0 // pred_region
    _
  $region41: #{marked_cnn_forward.1} parent=0 // pred_fallthru
    _

</llo_original>
